<compile_context>
chip_gen: v5e
topology: v5e:2x2
jax: 0.10.0
libtpu: 0.0.40
codegen_flags: <defaults>
</compile_context>

<pallas_src>
import jax
import jax.numpy as jnp
from jax.experimental import pallas as pl
from jax.experimental.pallas import tpu as pltpu

_LANE = 128
_MIN_TS = 2048                             # lane tiles below this are overhead-dominated
_DEFAULT_BLOCK_BUDGET = 4 * 1024 * 1024    # bytes per x input block (tiled path)
_FUSED_SLAB_LIMIT = 6 * 1024 * 1024        # per-batch [C, S] slab budget (fused path)
_VMEM_MARGIN = 2 * 1024 * 1024             # headroom for small operands / internal scratch


def _round_up(x, m):
    return (x + m - 1) // m * m


# ----------------------------------------------------------------------------
# Kernels
# ----------------------------------------------------------------------------
def _scse_combine_kernel(x_ref, cse_ref, ws_ref, bs_ref, o_ref):
    """Tiled path.  One grid step == one (batch, spatial-tile) block.

    x_ref  : [1, C, TS]  input tile (channels on sublanes, spatial on lanes)
    cse_ref: [1, C, 1]   per-batch cSE channel scale (already sigmoid'ed), f32
    ws_ref : [C, 1]      sSE 1x1x1 conv weight (C -> 1), f32
    bs_ref : [1, 1]      sSE conv bias (SMEM scalar), f32
    o_ref  : [1, C, TS]
    """
    x = x_ref[0].astype(jnp.float32)               # [C, TS]
    cse = cse_ref[0]                               # [C, 1]

    # sSE: per-voxel sigmoid of a channel-weighted sum (VPU mul + XLU sublane
    # reduce) -> lane-dense [1, TS].  No MXU involvement.
    sse = jax.nn.sigmoid(
        jnp.sum(x * ws_ref[...], axis=0, keepdims=True) + bs_ref[0, 0])

    # Combine: x * (cSE + sSE)   (broadcast add, then one multiply)
    o_ref[0] = (x * (cse + sse)).astype(o_ref.dtype)


def _scse_fused_kernel(x_ref, w1_ref, b1_ref, w2t_ref, b2_ref, ws_ref, bs_ref,
                       o_ref):
    """Fused path.  One grid step == one full batch slab.

    x_ref  : [1, C, S]   full per-batch slab (resident in VMEM)
    w1_ref : [C, Cr]     cSE squeeze weight
    b1_ref : [1, Cr]     cSE squeeze bias
    w2t_ref: [C, Cr]     cSE excite weight, stored transposed (no in-kernel T)
    b2_ref : [C, 1]      cSE excite bias (column)
    ws_ref : [C, 1]      sSE weight
    bs_ref : [1, 1]      sSE bias (SMEM scalar)
    o_ref  : [1, C, S]
    """
    x = x_ref[0].astype(jnp.float32)                         # [C, S]

    # cSE: global average pool (lane reduce) + tiny MLP + sigmoid -> [C, 1].
    mean = jnp.mean(x, axis=1, keepdims=True)                # [C, 1]
    hid = jnp.maximum(
        jnp.sum(mean * w1_ref[...], axis=0, keepdims=True) + b1_ref[...], 0.0)
    cse = jax.nn.sigmoid(
        jnp.sum(w2t_ref[...] * hid, axis=1, keepdims=True) + b2_ref[...])

    # sSE: channel-weighted sum per voxel -> [1, S].
    sse = jax.nn.sigmoid(
        jnp.sum(x * ws_ref[...], axis=0, keepdims=True) + bs_ref[0, 0])

    o_ref[0] = (x * (cse + sse)).astype(o_ref.dtype)


# ----------------------------------------------------------------------------
# Tile sizing / wrappers
# ----------------------------------------------------------------------------
def _choose_tile(s, c, itemsize, budget_bytes):
    """Largest lane-dense spatial tile (multiple of 128) within the per-block
    byte budget, clamped to >= _MIN_TS lanes (unless the array is smaller)."""
    padded = _round_up(s, _LANE)
    max_ts = max(_LANE, (budget_bytes // max(c * itemsize, 1)) // _LANE * _LANE)
    ts = min(padded, max_ts)
    ts = max(ts, min(_MIN_TS, padded))
    return ts


def scse_combine_pallas(x_ncs, cse_nc1, ws, bs,
                        block_budget_bytes=_DEFAULT_BLOCK_BUDGET):
    """Tiled combine.  x_ncs: [N, C, S]; cse_nc1: [N, C, 1] f32; ws: [C, 1];
    bs: [1, 1]."""
    n, c, s = x_ncs.shape
    itemsize = x_ncs.dtype.itemsize
    ts = _choose_tile(s, c, itemsize, block_budget_bytes)
    s_pad = _round_up(s, ts)
    if s_pad != s:
        x_ncs = jnp.pad(x_ncs, ((0, 0), (0, 0), (0, s_pad - s)))

    grid = (n, s_pad // ts)
    block_bytes = c * ts * itemsize
    # Real footprint: in + out blocks, each double-buffered = 4 x block bytes.
    vmem_limit = min(4 * block_bytes + _VMEM_MARGIN, 48 * 1024 * 1024)

    bytes_accessed = 2 * n * c * s_pad * itemsize + n * c * 4 + c * 4
    cost = pl.CostEstimate(flops=4 * n * c * s_pad,
                           transcendentals=n * s_pad,
                           bytes_accessed=bytes_accessed)

    out = pl.pallas_call(
        _scse_combine_kernel,
        out_shape=jax.ShapeDtypeStruct((n, c, s_pad), x_ncs.dtype),
        grid=grid,
        in_specs=[
            pl.BlockSpec((1, c, ts), lambda i, j: (i, 0, j)),   # x tile
            pl.BlockSpec((1, c, 1), lambda i, j: (i, 0, 0)),    # cSE scale
            pl.BlockSpec((c, 1), lambda i, j: (0, 0)),          # ws
            pl.BlockSpec(memory_space=pltpu.MemorySpace.SMEM),  # bs scalar
        ],
        out_specs=pl.BlockSpec((1, c, ts), lambda i, j: (i, 0, j)),
        compiler_params=pltpu.CompilerParams(
            dimension_semantics=("parallel", "parallel"),
            vmem_limit_bytes=int(vmem_limit)),
        cost_estimate=cost,
    )(x_ncs, cse_nc1, ws, bs)

    return out[:, :, :s] if s_pad != s else out


def scse_fused_pallas(x_ncs, params):
    """Single-pass fused SCSE.  x_ncs: [N, C, S] with the whole [C, S] slab
    resident in VMEM per grid step."""
    n, c, s = x_ncs.shape
    itemsize = x_ncs.dtype.itemsize
    cr = params["w1"].shape[1]

    w2t = jnp.transpose(params["w2"])        # [C, Cr]
    b2c = jnp.transpose(params["b2"])        # [C, 1]

    slab_bytes = c * s * itemsize
    vmem_limit = min(4 * slab_bytes + _VMEM_MARGIN, 48 * 1024 * 1024)

    bytes_accessed = 2 * n * c * s * itemsize + 4 * (2 * c * cr + 3 * c + cr + 1)
    cost = pl.CostEstimate(flops=6 * n * c * s,
                           transcendentals=n * (s + c + cr),
                           bytes_accessed=bytes_accessed)

    return pl.pallas_call(
        _scse_fused_kernel,
        out_shape=jax.ShapeDtypeStruct((n, c, s), x_ncs.dtype),
        grid=(n,),
        in_specs=[
            pl.BlockSpec((1, c, s), lambda i: (i, 0, 0)),       # x slab
            pl.BlockSpec((c, cr), lambda i: (0, 0)),            # w1
            pl.BlockSpec((1, cr), lambda i: (0, 0)),            # b1
            pl.BlockSpec((c, cr), lambda i: (0, 0)),            # w2^T
            pl.BlockSpec((c, 1), lambda i: (0, 0)),             # b2 (column)
            pl.BlockSpec((c, 1), lambda i: (0, 0)),             # ws
            pl.BlockSpec(memory_space=pltpu.MemorySpace.SMEM),  # bs scalar
        ],
        out_specs=pl.BlockSpec((1, c, s), lambda i: (i, 0, 0)),
        compiler_params=pltpu.CompilerParams(
            dimension_semantics=("parallel",),
            vmem_limit_bytes=int(vmem_limit)),
        cost_estimate=cost,
    )(x_ncs, params["w1"], params["b1"], w2t, b2c, params["ws"], params["bs"])


def attention_scse_forward(x_ncdhw, params, fused=None,
                           block_budget_bytes=_DEFAULT_BLOCK_BUDGET):
    """Matches Attention(name='scse', in_channels=C).forward on NCDHW input."""
    n, c, d, h, w = x_ncdhw.shape
    s = d * h * w
    x_ncs = x_ncdhw.reshape(n, c, s)               # pure reshape, no transpose

    if fused is None:
        fused = (c * s * x_ncdhw.dtype.itemsize) <= _FUSED_SLAB_LIMIT

    if fused:
        out_ncs = scse_fused_pallas(x_ncs, params)
    else:
        # cSE branch (tiny, per-batch), accumulated in f32.
        mean = jnp.mean(x_ncs, axis=2, dtype=jnp.float32)               # [N, C]
        hid = jnp.maximum(mean @ params["w1"] + params["b1"], 0.0)      # [N, Cr]
        cse = jax.nn.sigmoid(hid @ params["w2"] + params["b2"])         # [N, C]
        out_ncs = scse_combine_pallas(x_ncs, cse[:, :, None],
                                      params["ws"], params["bs"],
                                      block_budget_bytes=block_budget_bytes)

    return out_ncs.reshape(n, c, d, h, w)          # pure reshape back to NCDHW


def make_params(key, in_channels, reduction=16):
    """Deterministic init.  1x1x1 Conv3d weights [Cout, Cin, 1, 1, 1] are stored
    transposed as [Cin, Cout] matmul matrices (f32)."""
    cr = max(in_channels // reduction, 1)
    k1, k2, k3, k4, k5, k6 = jax.random.split(key, 6)
    scale = 0.1
    return {
        "w1": scale * jax.random.normal(k1, (in_channels, cr), jnp.float32),
        "b1": scale * jax.random.normal(k2, (1, cr), jnp.float32),
        "w2": scale * jax.random.normal(k3, (cr, in_channels), jnp.float32),
        "b2": scale * jax.random.normal(k4, (1, in_channels), jnp.float32),
        "ws": scale * jax.random.normal(k5, (in_channels, 1), jnp.float32),
        "bs": scale * jax.random.normal(k6, (1, 1), jnp.float32),
    }


def _reference_scse(x_ncdhw, params):
    """Pure-JAX reference with identical semantics (for correctness checks)."""
    xm = jnp.mean(x_ncdhw, axis=(2, 3, 4))                          # [N, C]
    hdn = jnp.maximum(xm @ params["w1"] + params["b1"], 0.0)        # [N, Cr]
    cse = jax.nn.sigmoid(hdn @ params["w2"] + params["b2"])         # [N, C]
    cse = cse[:, :, None, None, None]
    x_last = jnp.transpose(x_ncdhw, (0, 2, 3, 4, 1))                # NDHWC
    sse = jax.nn.sigmoid(x_last @ params["ws"] + params["bs"])      # [N,D,H,W,1]
    sse = jnp.transpose(sse, (0, 4, 1, 2, 3))                       # [N,1,D,H,W]
    return x_ncdhw * cse + x_ncdhw * sse


if __name__ == "__main__":
    key = jax.random.PRNGKey(0)
    kx1, kx2, kx3, kp = jax.random.split(key, 4)

    C, reduction = 32, 16
    params = make_params(kp, C, reduction)

    fwd = jax.jit(attention_scse_forward,
                  static_argnames=("fused", "block_budget_bytes"))

    # 1) Fused single-pass path (default): small decoder-level feature map.
    x1 = jax.random.normal(kx1, (2, C, 4, 8, 8), jnp.float32)       # S = 256
    out1 = jax.block_until_ready(fwd(x1, params))
    ref1 = _reference_scse(x1, params)
    assert out1.shape == x1.shape
    assert jnp.allclose(out1, ref1, atol=1e-5, rtol=1e-5), "fused f32 mismatch"

    # 2) Tiled streaming path, multi-block grid (small budget -> TS=2048, grid (2,2)).
    x2 = jax.random.normal(kx2, (2, C, 4, 32, 32), jnp.float32)     # S = 4096
    out2 = jax.block_until_ready(
        fwd(x2, params, fused=False, block_budget_bytes=256 * 1024))
    ref2 = _reference_scse(x2, params)
    assert jnp.allclose(out2, ref2, atol=1e-5, rtol=1e-5), "tiled f32 mismatch"

    # 3) Tiled path with S not a multiple of 128 (exercises lane padding).
    x3 = jax.random.normal(kx3, (2, C, 3, 5, 7), jnp.float32)       # S = 105
    out3 = jax.block_until_ready(fwd(x3, params, fused=False))
    ref3 = _reference_scse(x3, params)
    assert jnp.allclose(out3, ref3, atol=1e-5, rtol=1e-5), "padded tiled mismatch"

    # 4) bf16 I/O through the fused kernel (math in f32, store in bf16).
    x4 = x1.astype(jnp.bfloat16)
    out4 = jax.block_until_ready(fwd(x4, params))
    ref4 = _reference_scse(x4.astype(jnp.float32), params)
    assert out4.dtype == jnp.bfloat16
    assert jnp.allclose(out4.astype(jnp.float32), ref4, atol=1e-2, rtol=1e-2), \
        "fused bf16 mismatch"

    print("KERNEL_OK")
</pallas_src>

<mosaic_0001>
module attributes {stable_mosaic.version = 11 : i64} {
  func.func @_scse_fused_kernel(%arg0: i32, %arg1: memref<1x32x256xf32, #tpu.memory_space<vmem>>, %arg2: memref<32x2xf32, #tpu.memory_space<vmem>>, %arg3: memref<1x2xf32, #tpu.memory_space<vmem>>, %arg4: memref<32x2xf32, #tpu.memory_space<vmem>>, %arg5: memref<32x1xf32, #tpu.memory_space<vmem>>, %arg6: memref<32x1xf32, #tpu.memory_space<vmem>>, %arg7: memref<1x1xf32, #tpu.memory_space<smem>>, %arg8: memref<1x32x256xf32, #tpu.memory_space<vmem>>) attributes {dimension_semantics = [#tpu.dimension_semantics<parallel>], iteration_bounds = array<i64: 2>, scalar_prefetch = 0 : i64, scratch_operands = 0 : i64, tpu.core_type = #tpu.core_type<tc>, window_params = [{transform_indices = @transform_0, window_bounds = array<i64: 1, 32, 256>}, {pipeline_mode = #tpu.pipeline_mode<synchronous>, transform_indices = @transform_1, window_bounds = array<i64: 32, 2>}, {pipeline_mode = #tpu.pipeline_mode<synchronous>, transform_indices = @transform_2, window_bounds = array<i64: 1, 2>}, {pipeline_mode = #tpu.pipeline_mode<synchronous>, transform_indices = @transform_3, window_bounds = array<i64: 32, 2>}, {pipeline_mode = #tpu.pipeline_mode<synchronous>, transform_indices = @transform_4, window_bounds = array<i64: 32, 1>}, {pipeline_mode = #tpu.pipeline_mode<synchronous>, transform_indices = @transform_5, window_bounds = array<i64: 32, 1>}, {transform_indices = @transform_6, window_bounds = array<i64: 1, 1>}, {transform_indices = @transform_7, window_bounds = array<i64: 1, 32, 256>}]} {
    %c0 = arith.constant 0 : index
    %c0_0 = arith.constant 0 : index
    %c0_1 = arith.constant 0 : index
    %0 = vector.load %arg1[%c0, %c0_0, %c0_1] : memref<1x32x256xf32, #tpu.memory_space<vmem>>, vector<1x32x256xf32>
    %1 = vector.shape_cast %0 : vector<1x32x256xf32> to vector<32x256xf32>
    %cst = arith.constant dense<0.000000e+00> : vector<32xf32>
    %2 = vector.multi_reduction <add>, %1, %cst [1] : vector<32x256xf32> to vector<32xf32>
    %3 = vector.shape_cast %2 : vector<32xf32> to vector<32x1xf32>
    %cst_2 = arith.constant 2.560000e+02 : f32
    %4 = vector.broadcast %cst_2 : f32 to vector<32x1xf32>
    %5 = arith.divf %3, %4 : vector<32x1xf32>
    %c0_3 = arith.constant 0 : index
    %c0_4 = arith.constant 0 : index
    %6 = vector.load %arg2[%c0_3, %c0_4] : memref<32x2xf32, #tpu.memory_space<vmem>>, vector<32x2xf32>
    %7 = vector.broadcast %5 : vector<32x1xf32> to vector<32x2xf32>
    %8 = arith.mulf %7, %6 : vector<32x2xf32>
    %cst_5 = arith.constant dense<0.000000e+00> : vector<2xf32>
    %9 = vector.multi_reduction <add>, %8, %cst_5 [0] : vector<32x2xf32> to vector<2xf32>
    %10 = vector.shape_cast %9 : vector<2xf32> to vector<1x2xf32>
    %c0_6 = arith.constant 0 : index
    %c0_7 = arith.constant 0 : index
    %11 = vector.load %arg3[%c0_6, %c0_7] : memref<1x2xf32, #tpu.memory_space<vmem>>, vector<1x2xf32>
    %12 = arith.addf %10, %11 : vector<1x2xf32>
    %cst_8 = arith.constant 0.000000e+00 : f32
    %13 = vector.broadcast %cst_8 : f32 to vector<1x2xf32>
    %14 = arith.maximumf %12, %13 : vector<1x2xf32>
    %c0_9 = arith.constant 0 : index
    %c0_10 = arith.constant 0 : index
    %15 = vector.load %arg4[%c0_9, %c0_10] : memref<32x2xf32, #tpu.memory_space<vmem>>, vector<32x2xf32>
    %16 = vector.broadcast %14 : vector<1x2xf32> to vector<32x2xf32>
    %17 = arith.mulf %15, %16 : vector<32x2xf32>
    %cst_11 = arith.constant dense<0.000000e+00> : vector<32xf32>
    %18 = vector.multi_reduction <add>, %17, %cst_11 [1] : vector<32x2xf32> to vector<32xf32>
    %19 = vector.shape_cast %18 : vector<32xf32> to vector<32x1xf32>
    %c0_12 = arith.constant 0 : index
    %c0_13 = arith.constant 0 : index
    %20 = vector.load %arg5[%c0_12, %c0_13] : memref<32x1xf32, #tpu.memory_space<vmem>>, vector<32x1xf32>
    %21 = arith.addf %19, %20 : vector<32x1xf32>
    %22 = arith.negf %21 : vector<32x1xf32>
    %23 = math.exp %22 : vector<32x1xf32>
    %cst_14 = arith.constant 1.000000e+00 : f32
    %24 = vector.broadcast %cst_14 : f32 to vector<32x1xf32>
    %25 = arith.addf %24, %23 : vector<32x1xf32>
    %26 = arith.divf %24, %25 : vector<32x1xf32>
    %c0_15 = arith.constant 0 : index
    %c0_16 = arith.constant 0 : index
    %27 = vector.load %arg6[%c0_15, %c0_16] : memref<32x1xf32, #tpu.memory_space<vmem>>, vector<32x1xf32>
    %28 = vector.broadcast %27 : vector<32x1xf32> to vector<32x256xf32>
    %29 = arith.mulf %1, %28 : vector<32x256xf32>
    %cst_17 = arith.constant dense<0.000000e+00> : vector<256xf32>
    %30 = vector.multi_reduction <add>, %29, %cst_17 [0] : vector<32x256xf32> to vector<256xf32>
    %31 = vector.shape_cast %30 : vector<256xf32> to vector<1x256xf32>
    %c0_18 = arith.constant 0 : index
    %c0_19 = arith.constant 0 : index
    %32 = memref.load %arg7[%c0_18, %c0_19] : memref<1x1xf32, #tpu.memory_space<smem>>
    %33 = vector.broadcast %32 : f32 to vector<1x256xf32>
    %34 = arith.addf %31, %33 : vector<1x256xf32>
    %35 = arith.negf %34 : vector<1x256xf32>
    %36 = math.exp %35 : vector<1x256xf32>
    %cst_20 = arith.constant 1.000000e+00 : f32
    %37 = vector.broadcast %cst_20 : f32 to vector<1x256xf32>
    %38 = arith.addf %37, %36 : vector<1x256xf32>
    %39 = arith.divf %37, %38 : vector<1x256xf32>
    %40 = vector.broadcast %26 : vector<32x1xf32> to vector<32x256xf32>
    %41 = vector.broadcast %39 : vector<1x256xf32> to vector<32x256xf32>
    %42 = arith.addf %40, %41 : vector<32x256xf32>
    %43 = arith.mulf %1, %42 : vector<32x256xf32>
    %c0_21 = arith.constant 0 : index
    %c0_22 = arith.constant 0 : index
    %c0_23 = arith.constant 0 : index
    %44 = vector.load %arg8[%c0_21, %c0_22, %c0_23] : memref<1x32x256xf32, #tpu.memory_space<vmem>>, vector<1x32x256xf32>
    %45 = vector.shape_cast %44 : vector<1x32x256xf32> to vector<32x256xf32>
    %46 = vector.shape_cast %43 : vector<32x256xf32> to vector<1x32x256xf32>
    tpu.vector_store %arg8[%c0_21, %c0_22, %c0_23], %46 {strides = array<i32>} : memref<1x32x256xf32, #tpu.memory_space<vmem>>, vector<1x32x256xf32>,
    return
  }
  func.func @transform_0(%arg0: i32) -> (i32, i32, i32) {
    %c0_i32 = arith.constant 0 : i32
    %c0_i32_0 = arith.constant 0 : i32
    %c0_i32_1 = arith.constant 0 : i32
    return %arg0, %c0_i32, %c0_i32_0 : i32, i32, i32
  }
  func.func @transform_1(%arg0: i32) -> (i32, i32) {
    %c0_i32 = arith.constant 0 : i32
    %c0_i32_0 = arith.constant 0 : i32
    %c0_i32_1 = arith.constant 0 : i32
    return %c0_i32, %c0_i32_0 : i32, i32
  }
  func.func @transform_2(%arg0: i32) -> (i32, i32) {
    %c0_i32 = arith.constant 0 : i32
    %c0_i32_0 = arith.constant 0 : i32
    %c0_i32_1 = arith.constant 0 : i32
    return %c0_i32, %c0_i32_0 : i32, i32
  }
  func.func @transform_3(%arg0: i32) -> (i32, i32) {
    %c0_i32 = arith.constant 0 : i32
    %c0_i32_0 = arith.constant 0 : i32
    %c0_i32_1 = arith.constant 0 : i32
    return %c0_i32, %c0_i32_0 : i32, i32
  }
  func.func @transform_4(%arg0: i32) -> (i32, i32) {
    %c0_i32 = arith.constant 0 : i32
    %c0_i32_0 = arith.constant 0 : i32
    %c0_i32_1 = arith.constant 0 : i32
    return %c0_i32, %c0_i32_0 : i32, i32
  }
  func.func @transform_5(%arg0: i32) -> (i32, i32) {
    %c0_i32 = arith.constant 0 : i32
    %c0_i32_0 = arith.constant 0 : i32
    %c0_i32_1 = arith.constant 0 : i32
    return %c0_i32, %c0_i32_0 : i32, i32
  }
  func.func @transform_6(%arg0: i32) -> (i32, i32) {
    %c0_i32 = arith.constant 0 : i32
    %c0_i32_0 = arith.constant 0 : i32
    %c0_i32_1 = arith.constant 0 : i32
    return %c0_i32, %c0_i32_0 : i32, i32
  }
  func.func @transform_7(%arg0: i32) -> (i32, i32, i32) {
    %c0_i32 = arith.constant 0 : i32
    %c0_i32_0 = arith.constant 0 : i32
    %c0_i32_1 = arith.constant 0 : i32
    return %arg0, %c0_i32, %c0_i32_0 : i32, i32, i32
  }
}

</mosaic_0001>

<llo_original>
// kernel: attention_scse_forward.1
$region0: #{attention_scse_forward.1}
  #allocation0 [shape = 'u32[]', space=smem, size = 0x4, offset = 0x4, fixed_abs, tag = 'smem constant byte address 0x4 - core index']
  #allocation1 [shape = 'u32[72,128]{1,0:T(1,128)}', space=vmem, size = 0x9000, scoped, tag = 'internal scratch']
  #allocation2 [shape = 'f32[1,1]{1,0:T(1,128)S(6)}', space=smem, size = 0x200, scoped, tag = 'scoped memory for attention_scse_forward.1']
  %s0 = inlined_call_operand.vmem [shape: f32[2,32,256], index: 0, kind: input, shape index: {}]
  %s1 = inlined_call_operand.vmem [shape: f32[32,2], index: 1, kind: input, shape index: {}]
  %s2 = inlined_call_operand.vmem [shape: f32[1,2], index: 2, kind: input, shape index: {}]
  %s3 = inlined_call_operand.vmem [shape: f32[32,2], index: 3, kind: input, shape index: {}]
  %s4 = inlined_call_operand.vmem [shape: f32[32,1], index: 4, kind: input, shape index: {}]
  %s5 = inlined_call_operand.vmem [shape: f32[32,1], index: 5, kind: input, shape index: {}]
  %s6 = inlined_call_operand.<no memory space> [shape: f32[1,1], index: 6, kind: input, shape index: {}]
  %s7 = inlined_call_operand.vmem [shape: f32[2,32,256], index: 7, kind: output, shape index: {}]
  %s8 = sld [smem:[#allocation0]]
  $region61: #{attention_scse_forward.1} parent=0
    _
  %s10 = ssub.s32 1, %s8
  %s11 = scalar_select 0, %s10, %s8
  %12 = sst [smem:[#allocation2]] %s6
  loop: start=0, step=1, limit=4
  $region2: #{attention_scse_forward.1} parent=0 // loop_pre_header
    _
  $region3: #{attention_scse_forward.1} parent=0 // loop_header
    %s14 = sphi 0, %s18
    %p15 = scmp.ge.s32.totalorder %s14, 4
    %s24 = sphi 0, %s26
    %s27 = sphi 0, %s24
    %s28 = sphi 0, %s27
    %s44 = sphi 0, %s28
    %s48 = sphi 0, %s48
    %s50 = sphi 0, %s48
    %s51 = sphi 0, %s50
    %s65 = sphi 0, %s51
    %s69 = sphi 0, %s69
    %s71 = sphi 0, %s69
    %s72 = sphi 0, %s71
    %s86 = sphi 0, %s72
    %s90 = sphi 0, %s90
    %s92 = sphi 0, %s90
    %s93 = sphi 0, %s92
    %s107 = sphi 0, %s93
    %s111 = sphi 0, %s111
    %s113 = sphi 0, %s111
    %s114 = sphi 0, %s113
    %s128 = sphi 0, %s114
    %s132 = sphi 0, %s132
    %s134 = sphi 0, %s132
    %s135 = sphi 0, %s134
    %s149 = sphi 0, %s135
    %s153 = sphi 0, %s153
    %s155 = sphi 0, %s153
    %s156 = sphi 0, %s155
    %s170 = sphi 0, %s156
    %s176 = sphi 0, %s178
    %s179 = sphi 0, %s176
    %s180 = sphi 0, %s179
    %s196 = sphi 0, %s180
  $region4: #{attention_scse_forward.1} parent=0 // loop_header_branch
    %17 = sbr.rel (%p15) target = $region8
  $region5: #{attention_scse_forward.1} parent=0 // loop_body
    %s19 = ssub.s32 %s14, 1
    %s20 = ssub.s32 %s14, 2
    %s21 = sadd.s32 %s14, 1
    %s22 = ssub.s32 %s14, %s21
    %p23 = scmp.eq.s32.totalorder %s22, 0
    %s25 = sadd.s32 %s24, 1
    %s26 = scalar_select %p23, %s24, %s25
    %p29 = pneg %p23
    %p30 = scmp.eq.s32.totalorder %s14, 1
    %p31 = por %p29, %p30
    %p32 = scmp.ne.s32.totalorder %s24, %s27
    %p33 = scmp.eq.s32.totalorder %s14, 0
    %p34 = por %p32, %p33
    %p35 = scmp.ne.s32.totalorder %s24, %s27
    %p36 = scmp.eq.s32.totalorder %s19, 1
    %p37 = por %p35, %p36
    %p38 = scmp.ne.s32.totalorder %s27, %s28
    %p39 = scmp.eq.s32.totalorder %s19, 0
    %p40 = por %p38, %p39
    %p41 = scmp.ne.s32.totalorder %s27, %s28
    %p42 = scmp.eq.s32.totalorder %s20, 1
    %p43 = por %p41, %p42
    %p45 = scmp.ne.s32.totalorder %s28, %s44
    %p46 = scmp.eq.s32.totalorder %s20, 0
    %p47 = por %p45, %p46
    %s49 = sadd.s32 %s48, 1
    %p52 = scmp.eq.s32.totalorder %s14, 1
    %p53 = scmp.ne.s32.totalorder %s48, %s50
    %p54 = scmp.eq.s32.totalorder %s14, 0
    %p55 = por %p53, %p54
    %p56 = scmp.ne.s32.totalorder %s48, %s50
    %p57 = scmp.eq.s32.totalorder %s19, 1
    %p58 = por %p56, %p57
    %p59 = scmp.ne.s32.totalorder %s50, %s51
    %p60 = scmp.eq.s32.totalorder %s19, 0
    %p61 = por %p59, %p60
    %p62 = scmp.ne.s32.totalorder %s50, %s51
    %p63 = scmp.eq.s32.totalorder %s20, 1
    %p64 = por %p62, %p63
    %p66 = scmp.ne.s32.totalorder %s51, %s65
    %p67 = scmp.eq.s32.totalorder %s20, 0
    %p68 = por %p66, %p67
    %s70 = sadd.s32 %s69, 1
    %p73 = scmp.eq.s32.totalorder %s14, 1
    %p74 = scmp.ne.s32.totalorder %s69, %s71
    %p75 = scmp.eq.s32.totalorder %s14, 0
    %p76 = por %p74, %p75
    %p77 = scmp.ne.s32.totalorder %s69, %s71
    %p78 = scmp.eq.s32.totalorder %s19, 1
    %p79 = por %p77, %p78
    %p80 = scmp.ne.s32.totalorder %s71, %s72
    %p81 = scmp.eq.s32.totalorder %s19, 0
    %p82 = por %p80, %p81
    %p83 = scmp.ne.s32.totalorder %s71, %s72
    %p84 = scmp.eq.s32.totalorder %s20, 1
    %p85 = por %p83, %p84
    %p87 = scmp.ne.s32.totalorder %s72, %s86
    %p88 = scmp.eq.s32.totalorder %s20, 0
    %p89 = por %p87, %p88
    %s91 = sadd.s32 %s90, 1
    %p94 = scmp.eq.s32.totalorder %s14, 1
    %p95 = scmp.ne.s32.totalorder %s90, %s92
    %p96 = scmp.eq.s32.totalorder %s14, 0
    %p97 = por %p95, %p96
    %p98 = scmp.ne.s32.totalorder %s90, %s92
    %p99 = scmp.eq.s32.totalorder %s19, 1
    %p100 = por %p98, %p99
    %p101 = scmp.ne.s32.totalorder %s92, %s93
    %p102 = scmp.eq.s32.totalorder %s19, 0
    %p103 = por %p101, %p102
    %p104 = scmp.ne.s32.totalorder %s92, %s93
    %p105 = scmp.eq.s32.totalorder %s20, 1
    %p106 = por %p104, %p105
    %p108 = scmp.ne.s32.totalorder %s93, %s107
    %p109 = scmp.eq.s32.totalorder %s20, 0
    %p110 = por %p108, %p109
    %s112 = sadd.s32 %s111, 1
    %p115 = scmp.eq.s32.totalorder %s14, 1
    %p116 = scmp.ne.s32.totalorder %s111, %s113
    %p117 = scmp.eq.s32.totalorder %s14, 0
    %p118 = por %p116, %p117
    %p119 = scmp.ne.s32.totalorder %s111, %s113
    %p120 = scmp.eq.s32.totalorder %s19, 1
    %p121 = por %p119, %p120
    %p122 = scmp.ne.s32.totalorder %s113, %s114
    %p123 = scmp.eq.s32.totalorder %s19, 0
    %p124 = por %p122, %p123
    %p125 = scmp.ne.s32.totalorder %s113, %s114
    %p126 = scmp.eq.s32.totalorder %s20, 1
    %p127 = por %p125, %p126
    %p129 = scmp.ne.s32.totalorder %s114, %s128
    %p130 = scmp.eq.s32.totalorder %s20, 0
    %p131 = por %p129, %p130
    %s133 = sadd.s32 %s132, 1
    %p136 = scmp.eq.s32.totalorder %s14, 1
    %p137 = scmp.ne.s32.totalorder %s132, %s134
    %p138 = scmp.eq.s32.totalorder %s14, 0
    %p139 = por %p137, %p138
    %p140 = scmp.ne.s32.totalorder %s132, %s134
    %p141 = scmp.eq.s32.totalorder %s19, 1
    %p142 = por %p140, %p141
    %p143 = scmp.ne.s32.totalorder %s134, %s135
    %p144 = scmp.eq.s32.totalorder %s19, 0
    %p145 = por %p143, %p144
    %p146 = scmp.ne.s32.totalorder %s134, %s135
    %p147 = scmp.eq.s32.totalorder %s20, 1
    %p148 = por %p146, %p147
    %p150 = scmp.ne.s32.totalorder %s135, %s149
    %p151 = scmp.eq.s32.totalorder %s20, 0
    %p152 = por %p150, %p151
    %s154 = sadd.s32 %s153, 1
    %p157 = scmp.eq.s32.totalorder %s14, 1
    %p158 = scmp.ne.s32.totalorder %s153, %s155
    %p159 = scmp.eq.s32.totalorder %s14, 0
    %p160 = por %p158, %p159
    %p161 = scmp.ne.s32.totalorder %s153, %s155
    %p162 = scmp.eq.s32.totalorder %s19, 1
    %p163 = por %p161, %p162
    %p164 = scmp.ne.s32.totalorder %s155, %s156
    %p165 = scmp.eq.s32.totalorder %s19, 0
    %p166 = por %p164, %p165
    %p167 = scmp.ne.s32.totalorder %s155, %s156
    %p168 = scmp.eq.s32.totalorder %s20, 1
    %p169 = por %p167, %p168
    %p171 = scmp.ne.s32.totalorder %s156, %s170
    %p172 = scmp.eq.s32.totalorder %s20, 0
    %p173 = por %p171, %p172
    %s174 = ssub.s32 %s14, %s21
    %p175 = scmp.eq.s32.totalorder %s174, 0
    %s177 = sadd.s32 %s176, 1
    %s178 = scalar_select %p175, %s176, %s177
    %p181 = pneg %p175
    %p182 = scmp.eq.s32.totalorder %s14, 1
    %p183 = por %p181, %p182
    %p184 = scmp.ne.s32.totalorder %s176, %s179
    %p185 = scmp.eq.s32.totalorder %s14, 0
    %p186 = por %p184, %p185
    %p187 = scmp.ne.s32.totalorder %s176, %s179
    %p188 = scmp.eq.s32.totalorder %s19, 1
    %p189 = por %p187, %p188
    %p190 = scmp.ne.s32.totalorder %s179, %s180
    %p191 = scmp.eq.s32.totalorder %s19, 0
    %p192 = por %p190, %p191
    %p193 = scmp.ne.s32.totalorder %s179, %s180
    %p194 = scmp.eq.s32.totalorder %s20, 1
    %p195 = por %p193, %p194
    %p197 = scmp.ne.s32.totalorder %s180, %s196
    %p198 = scmp.eq.s32.totalorder %s20, 0
    %p199 = por %p197, %p198
    %p200 = scmp.le.s32.totalorder 1, %s14
    %p201 = scmp.lt.s32.totalorder %s14, 3
    %p202 = pnand %p200, %p201
    %p203 = pneg %p202
    // Predicated region
    $region9: #{attention_scse_forward.1} parent=5 // pred_check
      _
    $region10: #{attention_scse_forward.1} parent=5 // pred_check_branch
      %205 = sbr.rel (%p202) target = $region12
    $region11: #{attention_scse_forward.1} parent=5 // pred_region
      %s206 = ssub.s32 %s14, 1
      // Predicated region
      $region13: #{attention_scse_forward.1} parent=11 // pred_check
        %p207 = pneg %p61
      $region14: #{attention_scse_forward.1} parent=11 // pred_check_branch
        %209 = sbr.rel (%p207) target = $region16
      $region15: #{attention_scse_forward.1} parent=11 // pred_region
        _
      $region16: #{attention_scse_forward.1} parent=11 // pred_fallthru
        _
      // Predicated region
      $region17: #{attention_scse_forward.1} parent=11 // pred_check
        %p210 = pneg %p82
      $region18: #{attention_scse_forward.1} parent=11 // pred_check_branch
        %212 = sbr.rel (%p210) target = $region20
      $region19: #{attention_scse_forward.1} parent=11 // pred_region
        _
      $region20: #{attention_scse_forward.1} parent=11 // pred_fallthru
        _
      // Predicated region
      $region21: #{attention_scse_forward.1} parent=11 // pred_check
        %p213 = pneg %p103
      $region22: #{attention_scse_forward.1} parent=11 // pred_check_branch
        %215 = sbr.rel (%p213) target = $region24
      $region23: #{attention_scse_forward.1} parent=11 // pred_region
        _
      $region24: #{attention_scse_forward.1} parent=11 // pred_fallthru
        _
      // Predicated region
      $region25: #{attention_scse_forward.1} parent=11 // pred_check
        %p216 = pneg %p124
      $region26: #{attention_scse_forward.1} parent=11 // pred_check_branch
        %218 = sbr.rel (%p216) target = $region28
      $region27: #{attention_scse_forward.1} parent=11 // pred_region
        _
      $region28: #{attention_scse_forward.1} parent=11 // pred_fallthru
        _
      // Predicated region
      $region29: #{attention_scse_forward.1} parent=11 // pred_check
        %p219 = pneg %p145
      $region30: #{attention_scse_forward.1} parent=11 // pred_check_branch
        %221 = sbr.rel (%p219) target = $region32
      $region31: #{attention_scse_forward.1} parent=11 // pred_region
        _
      $region32: #{attention_scse_forward.1} parent=11 // pred_fallthru
        _
      // Predicated region
      $region33: #{attention_scse_forward.1} parent=11 // pred_check
        %p222 = pneg %p166
      $region34: #{attention_scse_forward.1} parent=11 // pred_check_branch
        %224 = sbr.rel (%p222) target = $region36
      $region35: #{attention_scse_forward.1} parent=11 // pred_region
        _
      $region36: #{attention_scse_forward.1} parent=11 // pred_fallthru
        _
    $region12: #{attention_scse_forward.1} parent=5 // pred_fallthru
      _
    %p225 = scmp.lt.s32.totalorder %s14, 2
    // Predicated region
    $region37: #{attention_scse_forward.1} parent=5 // pred_check
      %p226 = pneg %p225
    $region38: #{attention_scse_forward.1} parent=5 // pred_check_branch
      %228 = sbr.rel (%p226) target = $region40
    $region39: #{attention_scse_forward.1} parent=5 // pred_region
      // Predicated region
      $region41: #{attention_scse_forward.1} parent=39 // pred_check
        %p229 = pneg %p34
      $region42: #{attention_scse_forward.1} parent=39 // pred_check_branch
        %231 = sbr.rel (%p229) target = $region44
      $region43: #{attention_scse_forward.1} parent=39 // pred_region
        %p232 = scmp.lt.s32.totalorder %s14, 1
        %s233 = scalar_select %p232, %s14, 1
        %s234 = smul.addr %s233, 8
        %s235 = smul.addr %s234, 8
        %s236 = scalar_lea.vmem %s0, %s235
      $region44: #{attention_scse_forward.1} parent=39 // pred_fallthru
        _
    $region40: #{attention_scse_forward.1} parent=5 // pred_fallthru
      _
    %p237 = scmp.le.s32.totalorder 1, %s14
    %p238 = scmp.lt.s32.totalorder %s14, 3
    %p239 = pnand %p237, %p238
    %p240 = pneg %p239
    // Predicated region
    $region45: #{attention_scse_forward.1} parent=5 // pred_check
      _
    $region46: #{attention_scse_forward.1} parent=5 // pred_check_branch
      %242 = sbr.rel (%p239) target = $region48
    $region47: #{attention_scse_forward.1} parent=5 // pred_region
      %s243 = ssub.s32 %s14, 1
      %p244 = scmp.lt.s32.totalorder %s19, 1
      %s245 = scalar_select %p244, %s19, 1
      %s246 = smul.addr %s245, 8
      %s247 = smul.addr %s246, 8
      %s248 = scalar_lea.vmem %s0, %s247
      %p249 = pneg %p40
      %p250 = pneg %p37
      %p251 = pneg %p61
      %p252 = pneg %p58
      %p253 = pneg %p82
      %p254 = pneg %p79
      %p255 = pneg %p103
      %p256 = pneg %p100
      %p257 = pneg %p124
      %p258 = pneg %p121
      %p259 = pneg %p145
      %p260 = pneg %p142
      %p261 = pneg %p166
      %p262 = pneg %p163
      %p263 = pneg %p192
      %p264 = pneg %p189
      %p265 = scmp.lt.s32.totalorder %s19, 1
      %s266 = scalar_select %p265, %s19, 1
      %s267 = smul.addr %s266, 8
      %s268 = smul.addr %s267, 8
      %s269 = scalar_lea.vmem %s7, %s268
      %p270 = scmp.lt.s32.totalorder %s19, 1
      %s271 = scalar_select %p270, %s19, 1
      %s272 = smul.addr %s271, 8
      %s273 = smul.addr %s272, 8
      %s274 = scalar_lea.vmem %s0, %s273
      %p275 = scmp.lt.s32.totalorder %s19, 1
      %s276 = scalar_select %p275, %s19, 1
      %s277 = smul.addr %s276, 8
      %s278 = smul.addr %s277, 8
      %s279 = scalar_lea.vmem %s7, %s278
      %v280 = vld [vmem:[%s274] sm:$0xff]
      %v281 = vld [vmem:[%s274 + $0x8] sm:$0xff]
      %v282 = vld [vmem:[%s274 + $0x10] sm:$0xff]
      %v283 = vld [vmem:[%s274 + $0x18] sm:$0xff]
      %v284 = vld [vmem:[%s274 + $0x20] sm:$0xff]
      %v285 = vld [vmem:[%s274 + $0x28] sm:$0xff]
      %v286 = vld [vmem:[%s274 + $0x30] sm:$0xff]
      %v287 = vld [vmem:[%s274 + $0x38] sm:$0xff]
      %v288 = vadd.f32 %v280, %v281
      %289 = vadd.xlane.f32.xlu0 %v288
      %v290 = vpop.xlane.xlu0 %289
      %v291 = vadd.f32 %v282, %v283
      %292 = vadd.xlane.f32.xlu0 %v291
      %v293 = vpop.xlane.xlu0 %292
      %v294 = vadd.f32 %v284, %v285
      %295 = vadd.xlane.f32.xlu0 %v294
      %v296 = vpop.xlane.xlu0 %295
      %v297 = vadd.f32 %v286, %v287
      %298 = vadd.xlane.f32.xlu0 %v297
      %v299 = vpop.xlane.xlu0 %298
      %v300 = vrcp.pop 256.0
      %v301 = vmul.f32 256.0, %v300
      %v302 = vsub.f32 1.0, %v301
      %v303 = vmul.f32 %v300, %v302
      %v304 = vadd.f32 %v300, %v303
      %vm305 = vweird.f32 %v300
      %v306 = vsel %vm305, %v300, %v304
      %v307 = vmul.f32 %v290, %v306
      %v308 = vmul.f32 %v293, %v306
      %v309 = vmul.f32 %v296, %v306
      %v310 = vmul.f32 %v299, %v306
      %v311 = vld [vmem:[%s1] sm:$0xff]
      %v312 = vld [vmem:[%s1 + $0x8] sm:$0xff]
      %v313 = vld [vmem:[%s1 + $0x10] sm:$0xff]
      %v314 = vld [vmem:[%s1 + $0x18] sm:$0xff]
      %v315 = vmul.f32 %v307, %v311
      %v316 = vmul.f32 %v308, %v312
      %v317 = vmul.f32 %v309, %v313
      %v318 = vmul.f32 %v310, %v314
      %vm319 = vcmask 15360
      %v320 = vsel %vm319, %v315, 0.0
      %v321 = vsel %vm319, %v316, 0.0
      %v322 = vadd.f32 %v320, %v321
      %v323 = vsel %vm319, %v317, 0.0
      %v324 = vadd.f32 %v322, %v323
      %v325 = vsel %vm319, %v318, 0.0
      %v326 = vadd.f32 %v324, %v325
      %v327 = vrot.slane %v326, 4
      %v328 = vadd.f32 %v326, %v327
      %v329 = vrot.slane %v328, 2
      %v330 = vadd.f32 %v328, %v329
      %v331 = vrot.slane %v330, 1
      %v332 = vadd.f32 %v330, %v331
      %v333 = vld [vmem:[%s2] sm:$0x1]
      %v334 = vadd.f32 %v332, %v333
      %v335 = vmax.f32 %v334, 0.0
      %v336 = vld [vmem:[%s3] sm:$0xff]
      %v337 = vld [vmem:[%s3 + $0x8] sm:$0xff]
      %v338 = vld [vmem:[%s3 + $0x10] sm:$0xff]
      %v339 = vld [vmem:[%s3 + $0x18] sm:$0xff]
      %v340 = vperm.slane %v335, 0
      %v341 = vmul.f32 %v336, %v340
      %v342 = vmul.f32 %v337, %v340
      %v343 = vmul.f32 %v338, %v340
      %v344 = vmul.f32 %v339, %v340
      %v345 = vsel %vm319, %v341, 0.0
      %346 = vadd.xlane.f32.xlu0 %v345
      %v347 = vpop.xlane.xlu0 %346
      %v348 = vsel %vm319, %v342, 0.0
      %349 = vadd.xlane.f32.xlu0 %v348
      %v350 = vpop.xlane.xlu0 %349
      %v351 = vsel %vm319, %v343, 0.0
      %352 = vadd.xlane.f32.xlu0 %v351
      %v353 = vpop.xlane.xlu0 %352
      %v354 = vsel %vm319, %v344, 0.0
      %355 = vadd.xlane.f32.xlu0 %v354
      %v356 = vpop.xlane.xlu0 %355
      %v357 = vld [vmem:[%s4] sm:$0xff]
      %v358 = vld [vmem:[%s4 + $0x8] sm:$0xff]
      %v359 = vld [vmem:[%s4 + $0x10] sm:$0xff]
      %v360 = vld [vmem:[%s4 + $0x18] sm:$0xff]
      %v361 = vadd.f32 %v347, %v357
      %v362 = vadd.f32 %v350, %v358
      %v363 = vadd.f32 %v353, %v359
      %v364 = vadd.f32 %v356, %v360
      %v365 = vxor.u32 %v361, 2147483648
      %v366 = vxor.u32 %v362, 2147483648
      %v367 = vxor.u32 %v363, 2147483648
      %v368 = vxor.u32 %v364, 2147483648
      %v369 = vmul.f32 %v365, 1.442695
      %v370 = vpow.pop %v369
      %v371 = vmul.f32 %v366, 1.442695
      %v372 = vpow.pop %v371
      %v373 = vmul.f32 %v367, 1.442695
      %v374 = vpow.pop %v373
      %v375 = vmul.f32 %v368, 1.442695
      %v376 = vpow.pop %v375
      %v377 = vadd.f32 %v370, 1.0
      %v378 = vadd.f32 %v372, 1.0
      %v379 = vadd.f32 %v374, 1.0
      %v380 = vadd.f32 %v376, 1.0
      %v381 = vrcp.pop %v377
      %v382 = vmul.f32 %v377, %v381
      %v383 = vsub.f32 1.0, %v382
      %v384 = vmul.f32 %v381, %v383
      %v385 = vadd.f32 %v381, %v384
      %vm386 = vweird.f32 %v377
      %vm387 = vweird.f32 %v381
      %vm388 = vmor %vm386, %vm387
      %v389 = vsel %vm388, %v381, %v385
      %v390 = vand.u32 2147483647, %v377
      %vm391 = vcmp.eq.f32.partialorder %v390, 8.507059e+37
      %v392 = vand.u32 %v377, 2147483648
      %v393 = vor.u32 1.1754944e-38, %v392
      %v394 = vsel %vm391, %v393, %v389
      %v395 = vmul.f32 1.0, %v394
      %v396 = vrcp.pop %v378
      %v397 = vmul.f32 %v378, %v396
      %v398 = vsub.f32 1.0, %v397
      %v399 = vmul.f32 %v396, %v398
      %v400 = vadd.f32 %v396, %v399
      %vm401 = vweird.f32 %v378
      %vm402 = vweird.f32 %v396
      %vm403 = vmor %vm401, %vm402
      %v404 = vsel %vm403, %v396, %v400
      %v405 = vand.u32 2147483647, %v378
      %vm406 = vcmp.eq.f32.partialorder %v405, 8.507059e+37
      %v407 = vand.u32 %v378, 2147483648
      %v408 = vor.u32 1.1754944e-38, %v407
      %v409 = vsel %vm406, %v408, %v404
      %v410 = vmul.f32 1.0, %v409
      %v411 = vrcp.pop %v379
      %v412 = vmul.f32 %v379, %v411
      %v413 = vsub.f32 1.0, %v412
      %v414 = vmul.f32 %v411, %v413
      %v415 = vadd.f32 %v411, %v414
      %vm416 = vweird.f32 %v379
      %vm417 = vweird.f32 %v411
      %vm418 = vmor %vm416, %vm417
      %v419 = vsel %vm418, %v411, %v415
      %v420 = vand.u32 2147483647, %v379
      %vm421 = vcmp.eq.f32.partialorder %v420, 8.507059e+37
      %v422 = vand.u32 %v379, 2147483648
      %v423 = vor.u32 1.1754944e-38, %v422
      %v424 = vsel %vm421, %v423, %v419
      %v425 = vmul.f32 1.0, %v424
      %v426 = vrcp.pop %v380
      %v427 = vmul.f32 %v380, %v426
      %v428 = vsub.f32 1.0, %v427
      %v429 = vmul.f32 %v426, %v428
      %v430 = vadd.f32 %v426, %v429
      %vm431 = vweird.f32 %v380
      %vm432 = vweird.f32 %v426
      %vm433 = vmor %vm431, %vm432
      %v434 = vsel %vm433, %v426, %v430
      %v435 = vand.u32 2147483647, %v380
      %vm436 = vcmp.eq.f32.partialorder %v435, 8.507059e+37
      %v437 = vand.u32 %v380, 2147483648
      %v438 = vor.u32 1.1754944e-38, %v437
      %v439 = vsel %vm436, %v438, %v434
      %v440 = vmul.f32 1.0, %v439
      %v441 = vld [vmem:[%s5] sm:$0xff]
      %v442 = vld [vmem:[%s5 + $0x8] sm:$0xff]
      %v443 = vld [vmem:[%s5 + $0x10] sm:$0xff]
      %v444 = vld [vmem:[%s5 + $0x18] sm:$0xff]
      %446 = vset.pattern.permute.xlu0 0
      %447 = vperm.xlu0 %446, %v441
      %v448 = vpop.permute.xlu0 %447
      %451 = vset.pattern.permute.xlu0 0
      %452 = vperm.xlu0 %451, %v442
      %v453 = vpop.permute.xlu0 %452
      %456 = vset.pattern.permute.xlu0 0
      %457 = vperm.xlu0 %456, %v443
      %v458 = vpop.permute.xlu0 %457
      %461 = vset.pattern.permute.xlu0 0
      %462 = vperm.xlu0 %461, %v444
      %v463 = vpop.permute.xlu0 %462
      %v465 = vmul.f32 %v280, %v448
      %v466 = vmul.f32 %v281, %v448
      %v467 = vmul.f32 %v282, %v453
      %v468 = vmul.f32 %v283, %v453
      %v469 = vmul.f32 %v284, %v458
      %v470 = vmul.f32 %v285, %v458
      %v471 = vmul.f32 %v286, %v463
      %v472 = vmul.f32 %v287, %v463
      %v473 = vadd.f32 %v465, %v467
      %v474 = vadd.f32 %v473, %v469
      %v475 = vadd.f32 %v474, %v471
      %v476 = vrot.slane %v475, 4
      %v477 = vadd.f32 %v475, %v476
      %v478 = vrot.slane %v477, 2
      %v479 = vadd.f32 %v477, %v478
      %v480 = vrot.slane %v479, 1
      %v481 = vadd.f32 %v479, %v480
      %v482 = vadd.f32 %v466, %v468
      %v483 = vadd.f32 %v482, %v470
      %v484 = vadd.f32 %v483, %v472
      %v485 = vrot.slane %v484, 4
      %v486 = vadd.f32 %v484, %v485
      %v487 = vrot.slane %v486, 2
      %v488 = vadd.f32 %v486, %v487
      %v489 = vrot.slane %v488, 1
      %v490 = vadd.f32 %v488, %v489
      %s491 = sld [smem:[#allocation2]]
      %v492 = vstv %s491
      %v493 = vadd.f32 %v481, %v492
      %v494 = vadd.f32 %v490, %v492
      %v495 = vxor.u32 %v493, 2147483648
      %v496 = vxor.u32 %v494, 2147483648
      %v497 = vmul.f32 %v495, 1.442695
      %v498 = vpow.pop %v497
      %v499 = vmul.f32 %v496, 1.442695
      %v500 = vpow.pop %v499
      %v501 = vadd.f32 %v498, 1.0
      %v502 = vadd.f32 %v500, 1.0
      %v503 = vrcp.pop %v501
      %v504 = vmul.f32 %v501, %v503
      %v505 = vsub.f32 1.0, %v504
      %v506 = vmul.f32 %v503, %v505
      %v507 = vadd.f32 %v503, %v506
      %vm508 = vweird.f32 %v501
      %vm509 = vweird.f32 %v503
      %vm510 = vmor %vm508, %vm509
      %v511 = vsel %vm510, %v503, %v507
      %v512 = vand.u32 2147483647, %v501
      %vm513 = vcmp.eq.f32.partialorder %v512, 8.507059e+37
      %v514 = vand.u32 %v501, 2147483648
      %v515 = vor.u32 1.1754944e-38, %v514
      %v516 = vsel %vm513, %v515, %v511
      %v517 = vmul.f32 1.0, %v516
      %v518 = vrcp.pop %v502
      %v519 = vmul.f32 %v502, %v518
      %v520 = vsub.f32 1.0, %v519
      %v521 = vmul.f32 %v518, %v520
      %v522 = vadd.f32 %v518, %v521
      %vm523 = vweird.f32 %v502
      %vm524 = vweird.f32 %v518
      %vm525 = vmor %vm523, %vm524
      %v526 = vsel %vm525, %v518, %v522
      %v527 = vand.u32 2147483647, %v502
      %vm528 = vcmp.eq.f32.partialorder %v527, 8.507059e+37
      %v529 = vand.u32 %v502, 2147483648
      %v530 = vor.u32 1.1754944e-38, %v529
      %v531 = vsel %vm528, %v530, %v526
      %v532 = vmul.f32 1.0, %v531
      %534 = vset.pattern.permute.xlu0 0
      %535 = vperm.xlu0 %534, %v395
      %v536 = vpop.permute.xlu0 %535
      %539 = vset.pattern.permute.xlu0 0
      %540 = vperm.xlu0 %539, %v410
      %v541 = vpop.permute.xlu0 %540
      %544 = vset.pattern.permute.xlu0 0
      %545 = vperm.xlu0 %544, %v425
      %v546 = vpop.permute.xlu0 %545
      %549 = vset.pattern.permute.xlu0 0
      %550 = vperm.xlu0 %549, %v440
      %v551 = vpop.permute.xlu0 %550
      %v553 = vadd.f32 %v536, %v517
      %v554 = vadd.f32 %v536, %v532
      %v555 = vadd.f32 %v541, %v517
      %v556 = vadd.f32 %v541, %v532
      %v557 = vadd.f32 %v546, %v517
      %v558 = vadd.f32 %v546, %v532
      %v559 = vadd.f32 %v551, %v517
      %v560 = vadd.f32 %v551, %v532
      %v561 = vmul.f32 %v280, %v553
      %v562 = vmul.f32 %v281, %v554
      %v563 = vmul.f32 %v282, %v555
      %v564 = vmul.f32 %v283, %v556
      %v565 = vmul.f32 %v284, %v557
      %v566 = vmul.f32 %v285, %v558
      %v567 = vmul.f32 %v286, %v559
      %v568 = vmul.f32 %v287, %v560
      %569 = vst [vmem:[%s279] sm:$0xff] %v561
      %570 = vst [vmem:[%s279 + $0x8] sm:$0xff] %v562
      %571 = vst [vmem:[%s279 + $0x10] sm:$0xff] %v563
      %572 = vst [vmem:[%s279 + $0x18] sm:$0xff] %v564
      %573 = vst [vmem:[%s279 + $0x20] sm:$0xff] %v565
      %574 = vst [vmem:[%s279 + $0x28] sm:$0xff] %v566
      %575 = vst [vmem:[%s279 + $0x30] sm:$0xff] %v567
      %576 = vst [vmem:[%s279 + $0x38] sm:$0xff] %v568
      %p577 = scmp.lt.s32.totalorder %s19, 1
      %s578 = scalar_select %p577, %s19, 1
      %s579 = smul.addr %s578, 8
      %s580 = smul.addr %s579, 8
      %s581 = scalar_lea.vmem %s7, %s580
      // Predicated region
      $region49: #{attention_scse_forward.1} parent=47 // pred_check
        %p582 = pneg %p189
      $region50: #{attention_scse_forward.1} parent=47 // pred_check_branch
        %584 = sbr.rel (%p582) target = $region52
      $region51: #{attention_scse_forward.1} parent=47 // pred_region
        _
      $region52: #{attention_scse_forward.1} parent=47 // pred_fallthru
        _
    $region48: #{attention_scse_forward.1} parent=5 // pred_fallthru
      _
    %p585 = scmp.le.s32.totalorder 2, %s14
    // Predicated region
    $region53: #{attention_scse_forward.1} parent=5 // pred_check
      %p586 = pneg %p585
    $region54: #{attention_scse_forward.1} parent=5 // pred_check_branch
      %588 = sbr.rel (%p586) target = $region56
    $region55: #{attention_scse_forward.1} parent=5 // pred_region
      %s589 = ssub.s32 %s14, 2
      // Predicated region
      $region57: #{attention_scse_forward.1} parent=55 // pred_check
        %p590 = pneg %p195
      $region58: #{attention_scse_forward.1} parent=55 // pred_check_branch
        %592 = sbr.rel (%p590) target = $region60
      $region59: #{attention_scse_forward.1} parent=55 // pred_region
        %p593 = scmp.lt.s32.totalorder %s20, 1
        %s594 = scalar_select %p593, %s20, 1
        %s595 = smul.addr %s594, 8
        %s596 = smul.addr %s595, 8
        %s597 = scalar_lea.vmem %s7, %s596
      $region60: #{attention_scse_forward.1} parent=55 // pred_fallthru
        _
    $region56: #{attention_scse_forward.1} parent=5 // pred_fallthru
      _
  $region6: #{attention_scse_forward.1} parent=0 // loop_footer
    %s18 = sadd.s32 1, %s14
  $region7: #{attention_scse_forward.1} parent=0 // loop_footer_branch
    %13 = sbr.rel target = $region3
  $region8: #{attention_scse_forward.1} parent=0 // loop_exit
    _

</llo_original>
